<compile_context>
chip_gen: v6e
topology: v6e:2x2x1
jax: 0.10.0
libtpu: 0.0.40
codegen_flags: <defaults>
</compile_context>

<pallas_src>
import functools
import math

import jax
import jax.numpy as jnp
from jax.experimental import pallas as pl
from jax.experimental.pallas import tpu as pltpu


def _round_up(x, m):
    return ((x + m - 1) // m) * m


def _fused_kernel(basis_ref, feat_ref, w_ref, bias_ref, out_ref, *, support):
    """out[i_tile] = bias + sum_k sum_s basis[s, i_tile, k_tile] @ (features[k_tile] @ W[s]).

    basis_ref : (S, TM, TK)       bf16   (streamed)
    feat_ref  : (TK, F_in)        bf16   (streamed along k)
    w_ref     : (S, F_in, Fo_pad) bf16   (resident)
    bias_ref  : (1, Fo_pad)       f32    (resident)
    out_ref   : (TM, Fo_pad)      f32    resident accumulator across the k axis
    """
    k = pl.program_id(1)

    # Initialize the resident output block with the bias on the first k step.
    @pl.when(k == 0)
    def _():
        out_ref[...] = jnp.broadcast_to(bias_ref[...], out_ref.shape)

    feats = feat_ref[...]
    for s in range(support):
        # Stage-1 recompute for this contraction tile (tiny: K = F_in).
        fw_s = jnp.dot(feats, w_ref[s],
                       preferred_element_type=jnp.float32).astype(jnp.bfloat16)
        # Deep-K (K = TK) bf16 matmul, accumulated straight into the resident
        # f32 output block (no separate acc scratch).
        out_ref[...] += jnp.dot(basis_ref[s], fw_s,
                                preferred_element_type=jnp.float32)


def _pick_tiles(n, support):
    """Return (tm, tk, n_row_pad, n_col_pad)."""
    if n <= 128:
        # Single block equal to the full array extents: no padding needed.
        return n, n, n, n
    if n <= 1024:
        # Full-extent contraction tile (no K padding, single k step); split the
        # row axis in two so both v7x TensorCores are fed.  16-row alignment
        # keeps bf16 sublane tiling clean.
        tm = _round_up((n + 1) // 2, 16)
        return tm, n, 2 * tm, n
    # Large graphs: square tiles.  Pick the tile minimizing
    #   (zero-padded bf16 basis HBM traffic) + (per-grid-step overhead).
    best_t, best_cost = None, None
    for t in (1024, 512, 256, 128):
        n_pad = _round_up(n, t)
        traffic_s = support * 2.0 * n_pad * n_pad / 1.3e12   # ~HBM bandwidth
        steps = (n_pad // t) ** 2
        cost = traffic_s + steps * 0.35e-6
        if best_cost is None or cost < best_cost:
            best_t, best_cost = t, cost
    n_pad = _round_up(n, best_t)
    return best_t, best_t, n_pad, n_pad


def graph_conv_layer(features, basis, weight, bias=None):
    """Pallas-backed GraphConvLayer forward.

    features : (N, F_in) float32
    basis    : (S, N, N) float32   (stacked dense Chebyshev basis)
    weight   : (F_in * S, F_out) float32  (PyTorch parameter layout)
    bias     : (F_out,) float32 or None
    returns  : (N, F_out) float32
    """
    features = jnp.asarray(features)
    basis = jnp.asarray(basis)
    weight = jnp.asarray(weight)

    n, f_in = features.shape
    s_sup = basis.shape[0]
    f_out = weight.shape[1]
    assert weight.shape[0] == f_in * s_sup
    assert basis.shape == (s_sup, n, n)

    # (F_in*S, F_out) -> (S, F_in, F_out); matches the concat order along dim=1.
    weight_s = weight.reshape(s_sup, f_in, f_out)

    # Lane-dense output: pad F_out up to a multiple of 128, slice afterwards.
    fo_pad = _round_up(f_out, 128)
    if fo_pad != f_out:
        weight_s = jnp.pad(weight_s, ((0, 0), (0, 0), (0, fo_pad - f_out)))
    if bias is None:
        bias_p = jnp.zeros((1, fo_pad), jnp.float32)
    else:
        bias_p = jnp.pad(jnp.asarray(bias, jnp.float32).reshape(1, f_out),
                         ((0, 0), (0, fo_pad - f_out)))

    tm, tk, n_row_pad, n_col_pad = _pick_tiles(n, s_sup)

    # bf16 MXU operands; accumulation stays f32 in the kernel.
    basis_b = basis.astype(jnp.bfloat16)
    feats_b = features.astype(jnp.bfloat16)
    weight_b = weight_s.astype(jnp.bfloat16)

    if n_row_pad != n or n_col_pad != n:
        basis_b = jnp.pad(basis_b,
                          ((0, 0), (0, n_row_pad - n), (0, n_col_pad - n)))
    if n_col_pad != n:
        feats_b = jnp.pad(feats_b, ((0, n_col_pad - n), (0, 0)))

    grid = (n_row_pad // tm, n_col_pad // tk)

    out = pl.pallas_call(
        functools.partial(_fused_kernel, support=s_sup),
        out_shape=jax.ShapeDtypeStruct((n_row_pad, fo_pad), jnp.float32),
        grid_spec=pltpu.PrefetchScalarGridSpec(
            num_scalar_prefetch=0,
            grid=grid,
            in_specs=[
                pl.BlockSpec((s_sup, tm, tk), lambda i, k: (0, i, k)),        # basis
                pl.BlockSpec((tk, f_in), lambda i, k: (k, 0)),                # features
                pl.BlockSpec((s_sup, f_in, fo_pad), lambda i, k: (0, 0, 0)),  # weight
                pl.BlockSpec((1, fo_pad), lambda i, k: (0, 0)),               # bias
            ],
            out_specs=pl.BlockSpec((tm, fo_pad), lambda i, k: (i, 0)),
        ),
        compiler_params=pltpu.CompilerParams(
            dimension_semantics=("parallel", "arbitrary"),
            vmem_limit_bytes=32 * 1024 * 1024),
    )(basis_b, feats_b, weight_b, bias_p)

    return out[:n, :f_out]


def _reference(features, basis, weight, bias):
    s_sup = basis.shape[0]
    supports = jnp.concatenate([basis[s] @ features for s in range(s_sup)],
                               axis=1)
    out = supports @ weight
    if bias is not None:
        out = out + bias
    return out


def _run_case(key, n, f_in, support, f_out):
    k_feat, k_basis, k_w, k_b = jax.random.split(key, 4)
    features = jax.random.normal(k_feat, (n, f_in), dtype=jnp.float32)
    # Dense stand-in for the (sparse) Chebyshev basis matrices.
    basis = jax.random.normal(k_basis, (support, n, n), dtype=jnp.float32) / n
    # Parameter init mirroring reset_parameters(): stdv = 1/sqrt(out_features).
    stdv = 1.0 / math.sqrt(f_out)
    weight = jax.random.uniform(k_w, (f_in * support, f_out),
                                minval=-stdv, maxval=stdv, dtype=jnp.float32)
    bias = jax.random.uniform(k_b, (f_out,),
                              minval=-stdv, maxval=stdv, dtype=jnp.float32)

    out = jax.block_until_ready(graph_conv_layer(features, basis, weight, bias))
    ref = _reference(features, basis, weight, bias)
    assert out.shape == (n, f_out)
    # bf16 operands (f32 accumulation) -> loosened tolerance vs the f32 reference.
    assert jnp.allclose(out, ref, atol=2e-2, rtol=2e-2), (
        f"mismatch vs reference at n={n}")


if __name__ == "__main__":
    # Small shapes consistent with the module's forward:
    #   n_nodes=16, in_features=8, support=3, out_features=32
    key = jax.random.PRNGKey(0)
    k0, k1 = jax.random.split(key)

    _run_case(k0, n=16, f_in=8, support=3, f_out=32)    # benchmark shape
    _run_case(k1, n=256, f_in=8, support=3, f_out=32)   # 2 row tiles (megacore path)

    print("KERNEL_OK")
</pallas_src>

<mosaic_0001>
module attributes {stable_mosaic.version = 11 : i64} {
  func.func @_fused_kernel(%arg0: i32, %arg1: i32, %arg2: memref<3x16x16xbf16, #tpu.memory_space<vmem>>, %arg3: memref<16x8xbf16, #tpu.memory_space<vmem>>, %arg4: memref<3x8x128xbf16, #tpu.memory_space<vmem>>, %arg5: memref<1x128xf32, #tpu.memory_space<vmem>>, %arg6: memref<16x128xf32, #tpu.memory_space<vmem>>) attributes {dimension_semantics = [#tpu.dimension_semantics<parallel>, #tpu.dimension_semantics<arbitrary>], iteration_bounds = array<i64: 1, 1>, scalar_prefetch = 0 : i64, scratch_operands = 0 : i64, tpu.core_type = #tpu.core_type<tc>, window_params = [{transform_indices = @transform_0, window_bounds = array<i64: 3, 16, 16>}, {transform_indices = @transform_1, window_bounds = array<i64: 16, 8>}, {pipeline_mode = #tpu.pipeline_mode<synchronous>, transform_indices = @transform_2, window_bounds = array<i64: 3, 8, 128>}, {pipeline_mode = #tpu.pipeline_mode<synchronous>, transform_indices = @transform_3, window_bounds = array<i64: 1, 128>}, {transform_indices = @transform_4, window_bounds = array<i64: 16, 128>}]} {
    %c0_i32 = arith.constant 0 : i32
    %0 = arith.cmpi eq, %arg1, %c0_i32 : i32
    %1 = arith.extui %0 : i1 to i32
    %c0_i32_0 = arith.constant 0 : i32
    %2 = arith.cmpi ne, %1, %c0_i32_0 : i32
    scf.if %2 {
      %c0_35 = arith.constant 0 : index
      %c0_36 = arith.constant 0 : index
      %34 = vector.load %arg5[%c0_35, %c0_36] : memref<1x128xf32, #tpu.memory_space<vmem>>, vector<1x128xf32>
      %35 = vector.shape_cast %34 : vector<1x128xf32> to vector<1x128xf32>
      %36 = vector.broadcast %35 : vector<1x128xf32> to vector<16x128xf32>
      %c0_37 = arith.constant 0 : index
      %c0_38 = arith.constant 0 : index
      %37 = vector.load %arg6[%c0_37, %c0_38] : memref<16x128xf32, #tpu.memory_space<vmem>>, vector<16x128xf32>
      tpu.vector_store %arg6[%c0_37, %c0_38], %36 {strides = array<i32>} : memref<16x128xf32, #tpu.memory_space<vmem>>, vector<16x128xf32>,
    } else {
    }
    %c0 = arith.constant 0 : index
    %c0_1 = arith.constant 0 : index
    %3 = vector.load %arg3[%c0, %c0_1] : memref<16x8xbf16, #tpu.memory_space<vmem>>, vector<16x8xbf16>
    %c0_2 = arith.constant 0 : index
    %c0_3 = arith.constant 0 : index
    %c0_4 = arith.constant 0 : index
    %4 = vector.load %arg4[%c0_2, %c0_3, %c0_4] : memref<3x8x128xbf16, #tpu.memory_space<vmem>>, vector<1x8x128xbf16>
    %5 = vector.shape_cast %4 : vector<1x8x128xbf16> to vector<8x128xbf16>
    %cst = arith.constant dense<0.000000e+00> : vector<16x128xf32>
    %6 = tpu.matmul %3, %5, %cst {dimension_numbers = #tpu.dot_dimension_numbers<[1], [0], [0], [1], [0, 0, 1, 1], [], []>} : vector<16x8xbf16>, vector<8x128xbf16>, vector<16x128xf32> -> vector<16x128xf32>
    %7 = arith.truncf %6 : vector<16x128xf32> to vector<16x128xbf16>
    %c0_5 = arith.constant 0 : index
    %c0_6 = arith.constant 0 : index
    %8 = vector.load %arg6[%c0_5, %c0_6] : memref<16x128xf32, #tpu.memory_space<vmem>>, vector<16x128xf32>
    %c0_7 = arith.constant 0 : index
    %c0_8 = arith.constant 0 : index
    %c0_9 = arith.constant 0 : index
    %9 = vector.load %arg2[%c0_7, %c0_8, %c0_9] : memref<3x16x16xbf16, #tpu.memory_space<vmem>>, vector<1x16x16xbf16>
    %10 = vector.shape_cast %9 : vector<1x16x16xbf16> to vector<16x16xbf16>
    %cst_10 = arith.constant dense<0.000000e+00> : vector<16x128xf32>
    %11 = tpu.matmul %10, %7, %cst_10 {dimension_numbers = #tpu.dot_dimension_numbers<[1], [0], [0], [1], [0, 0, 1, 1], [], []>} : vector<16x16xbf16>, vector<16x128xbf16>, vector<16x128xf32> -> vector<16x128xf32>
    %12 = arith.addf %8, %11 : vector<16x128xf32>
    %c0_11 = arith.constant 0 : index
    %c0_12 = arith.constant 0 : index
    %13 = vector.load %arg6[%c0_11, %c0_12] : memref<16x128xf32, #tpu.memory_space<vmem>>, vector<16x128xf32>
    tpu.vector_store %arg6[%c0_11, %c0_12], %12 {strides = array<i32>} : memref<16x128xf32, #tpu.memory_space<vmem>>, vector<16x128xf32>,
    %c1 = arith.constant 1 : index
    %c0_13 = arith.constant 0 : index
    %c0_14 = arith.constant 0 : index
    %14 = vector.load %arg4[%c1, %c0_13, %c0_14] : memref<3x8x128xbf16, #tpu.memory_space<vmem>>, vector<1x8x128xbf16>
    %15 = vector.shape_cast %14 : vector<1x8x128xbf16> to vector<8x128xbf16>
    %cst_15 = arith.constant dense<0.000000e+00> : vector<16x128xf32>
    %16 = tpu.matmul %3, %15, %cst_15 {dimension_numbers = #tpu.dot_dimension_numbers<[1], [0], [0], [1], [0, 0, 1, 1], [], []>} : vector<16x8xbf16>, vector<8x128xbf16>, vector<16x128xf32> -> vector<16x128xf32>
    %17 = arith.truncf %16 : vector<16x128xf32> to vector<16x128xbf16>
    %c0_16 = arith.constant 0 : index
    %c0_17 = arith.constant 0 : index
    %18 = vector.load %arg6[%c0_16, %c0_17] : memref<16x128xf32, #tpu.memory_space<vmem>>, vector<16x128xf32>
    %c1_18 = arith.constant 1 : index
    %c0_19 = arith.constant 0 : index
    %c0_20 = arith.constant 0 : index
    %19 = vector.load %arg2[%c1_18, %c0_19, %c0_20] : memref<3x16x16xbf16, #tpu.memory_space<vmem>>, vector<1x16x16xbf16>
    %20 = vector.shape_cast %19 : vector<1x16x16xbf16> to vector<16x16xbf16>
    %cst_21 = arith.constant dense<0.000000e+00> : vector<16x128xf32>
    %21 = tpu.matmul %20, %17, %cst_21 {dimension_numbers = #tpu.dot_dimension_numbers<[1], [0], [0], [1], [0, 0, 1, 1], [], []>} : vector<16x16xbf16>, vector<16x128xbf16>, vector<16x128xf32> -> vector<16x128xf32>
    %22 = arith.addf %18, %21 : vector<16x128xf32>
    %c0_22 = arith.constant 0 : index
    %c0_23 = arith.constant 0 : index
    %23 = vector.load %arg6[%c0_22, %c0_23] : memref<16x128xf32, #tpu.memory_space<vmem>>, vector<16x128xf32>
    tpu.vector_store %arg6[%c0_22, %c0_23], %22 {strides = array<i32>} : memref<16x128xf32, #tpu.memory_space<vmem>>, vector<16x128xf32>,
    %c2 = arith.constant 2 : index
    %c0_24 = arith.constant 0 : index
    %c0_25 = arith.constant 0 : index
    %24 = vector.load %arg4[%c2, %c0_24, %c0_25] : memref<3x8x128xbf16, #tpu.memory_space<vmem>>, vector<1x8x128xbf16>
    %25 = vector.shape_cast %24 : vector<1x8x128xbf16> to vector<8x128xbf16>
    %cst_26 = arith.constant dense<0.000000e+00> : vector<16x128xf32>
    %26 = tpu.matmul %3, %25, %cst_26 {dimension_numbers = #tpu.dot_dimension_numbers<[1], [0], [0], [1], [0, 0, 1, 1], [], []>} : vector<16x8xbf16>, vector<8x128xbf16>, vector<16x128xf32> -> vector<16x128xf32>
    %27 = arith.truncf %26 : vector<16x128xf32> to vector<16x128xbf16>
    %c0_27 = arith.constant 0 : index
    %c0_28 = arith.constant 0 : index
    %28 = vector.load %arg6[%c0_27, %c0_28] : memref<16x128xf32, #tpu.memory_space<vmem>>, vector<16x128xf32>
    %c2_29 = arith.constant 2 : index
    %c0_30 = arith.constant 0 : index
    %c0_31 = arith.constant 0 : index
    %29 = vector.load %arg2[%c2_29, %c0_30, %c0_31] : memref<3x16x16xbf16, #tpu.memory_space<vmem>>, vector<1x16x16xbf16>
    %30 = vector.shape_cast %29 : vector<1x16x16xbf16> to vector<16x16xbf16>
    %cst_32 = arith.constant dense<0.000000e+00> : vector<16x128xf32>
    %31 = tpu.matmul %30, %27, %cst_32 {dimension_numbers = #tpu.dot_dimension_numbers<[1], [0], [0], [1], [0, 0, 1, 1], [], []>} : vector<16x16xbf16>, vector<16x128xbf16>, vector<16x128xf32> -> vector<16x128xf32>
    %32 = arith.addf %28, %31 : vector<16x128xf32>
    %c0_33 = arith.constant 0 : index
    %c0_34 = arith.constant 0 : index
    %33 = vector.load %arg6[%c0_33, %c0_34] : memref<16x128xf32, #tpu.memory_space<vmem>>, vector<16x128xf32>
    tpu.vector_store %arg6[%c0_33, %c0_34], %32 {strides = array<i32>} : memref<16x128xf32, #tpu.memory_space<vmem>>, vector<16x128xf32>,
    return
  }
  func.func @transform_0(%arg0: i32, %arg1: i32) -> (i32, i32, i32) {
    %c0_i32 = arith.constant 0 : i32
    %c0_i32_0 = arith.constant 0 : i32
    return %c0_i32, %arg0, %arg1 : i32, i32, i32
  }
  func.func @transform_1(%arg0: i32, %arg1: i32) -> (i32, i32) {
    %c0_i32 = arith.constant 0 : i32
    %c0_i32_0 = arith.constant 0 : i32
    return %arg1, %c0_i32 : i32, i32
  }
  func.func @transform_2(%arg0: i32, %arg1: i32) -> (i32, i32, i32) {
    %c0_i32 = arith.constant 0 : i32
    %c0_i32_0 = arith.constant 0 : i32
    %c0_i32_1 = arith.constant 0 : i32
    %c0_i32_2 = arith.constant 0 : i32
    return %c0_i32, %c0_i32_0, %c0_i32_1 : i32, i32, i32
  }
  func.func @transform_3(%arg0: i32, %arg1: i32) -> (i32, i32) {
    %c0_i32 = arith.constant 0 : i32
    %c0_i32_0 = arith.constant 0 : i32
    %c0_i32_1 = arith.constant 0 : i32
    return %c0_i32, %c0_i32_0 : i32, i32
  }
  func.func @transform_4(%arg0: i32, %arg1: i32) -> (i32, i32) {
    %c0_i32 = arith.constant 0 : i32
    %c0_i32_0 = arith.constant 0 : i32
    return %arg0, %c0_i32 : i32, i32
  }
}

</mosaic_0001>

<llo_original>
// kernel: tpu_custom_call.1
$region0: #{tpu_custom_call.1}
  #allocation0 [shape = 'u32[]', space=smem, size = 0x4, offset = 0x4, fixed_abs, tag = 'smem constant byte address 0x4 - core index']
  #allocation1 [shape = 'u32[144,128]{1,0:T(1,128)}', space=vmem, size = 0x12000, scoped, tag = 'internal scratch']
  %s0 = inlined_call_operand.hbm [shape: bf16[3,16,16], index: 0, kind: input, shape index: {}]
  %s1 = inlined_call_operand.vmem [shape: bf16[16,8], index: 1, kind: input, shape index: {}]
  %s2 = inlined_call_operand.vmem [shape: bf16[3,8,128], index: 2, kind: input, shape index: {}]
  %s3 = inlined_call_operand.vmem [shape: f32[1,128], index: 3, kind: input, shape index: {}]
  %s4 = inlined_call_operand.hbm [shape: f32[16,128], index: 4, kind: output, shape index: {}]
  %s5 = sld [smem:[#allocation0]]
  $region34: #{tpu_custom_call.1} parent=0
    _
  %s7 = ssub.s32 1, %s5
  %s8 = scalar_select 0, %s7, %s5
  $region1: #{tpu_custom_call.1} parent=0
    #allocation2 [shape = 'u8[12288]{0}', space=vmem, size = 0x3000, scoped, tag = 'input window, operand 0, single buffered']
    #allocation3 [shape = 's32[1]{0}', space=sflag, size = 0x4, scoped, tag = 'scoped memory for tpu_custom_call.1']
    #allocation4 [shape = 's32[1]{0}', space=sflag, size = 0x4, scoped, tag = 'scoped memory for tpu_custom_call.1']
    #allocation5 [shape = 'u8[8192]{0}', space=vmem, size = 0x2000, scoped, tag = 'output window, operand 0, single buffered']
    %9 = vsyncpa [#allocation3], 0
    %10 = vsyncpa [#allocation4], 0
    // Predicated region
    $region2: #{tpu_custom_call.1} parent=1 // pred_check
      _
    $region3: #{tpu_custom_call.1} parent=1 // pred_check_branch
      %12 = sbr.rel (0) target = $region5
    $region4: #{tpu_custom_call.1} parent=1 // pred_region
      %s14 = ssub.s32 384, 384
      %15 = vsyncadd [#allocation3], %s14
      %s16 = sshll.u32 [#allocation2], 4
      %s17 = int_to_ptr.vmem [resolvable:$true] %s16
      %22 = dma.hbm_to_vmem [thread:$0]  %s0, 384, %s17, [#allocation3], 64, 64, 4
    $region5: #{tpu_custom_call.1} parent=1 // pred_fallthru
      _
    // Predicated region
    $region6: #{tpu_custom_call.1} parent=1 // pred_check
      _
    $region7: #{tpu_custom_call.1} parent=1 // pred_check_branch
      %24 = sbr.rel (0) target = $region9
    $region8: #{tpu_custom_call.1} parent=1 // pred_region
      _
    $region9: #{tpu_custom_call.1} parent=1 // pred_fallthru
      _
    // Predicated region
    $region10: #{tpu_custom_call.1} parent=1 // pred_check
      _
    $region11: #{tpu_custom_call.1} parent=1 // pred_check_branch
      %26 = sbr.rel (0) target = $region13
    $region12: #{tpu_custom_call.1} parent=1 // pred_region
      _
    $region13: #{tpu_custom_call.1} parent=1 // pred_fallthru
      _
    // Predicated region
    $region14: #{tpu_custom_call.1} parent=1 // pred_check
      _
    $region15: #{tpu_custom_call.1} parent=1 // pred_check_branch
      %28 = sbr.rel (0) target = $region17
    $region16: #{tpu_custom_call.1} parent=1 // pred_region
      _
    $region17: #{tpu_custom_call.1} parent=1 // pred_fallthru
      _
    // Predicated region
    $region18: #{tpu_custom_call.1} parent=1 // pred_check
      _
    $region19: #{tpu_custom_call.1} parent=1 // pred_check_branch
      %30 = sbr.rel (0) target = $region21
    $region20: #{tpu_custom_call.1} parent=1 // pred_region
      %31 = dma.done [#allocation3], 384
    $region21: #{tpu_custom_call.1} parent=1 // pred_fallthru
      _
    %p33 = scmp.eq.s32.totalorder 0, 0
    // Predicated region
    $region22: #{tpu_custom_call.1} parent=1 // pred_check
      %p34 = pneg %p33
    $region23: #{tpu_custom_call.1} parent=1 // pred_check_branch
      %36 = sbr.rel (%p34) target = $region25
    $region24: #{tpu_custom_call.1} parent=1 // pred_region
      %v37 = vld [vmem:[%s3] sm:$0x1]
      %v39 = vlaneseq
      %v40 = vshrl.u32 %v39, 7
      %v41 = vsub.s32 0, %v40
      %v42 = vrot.slane %v37, %v41
      %44 = vst [vmem:[#allocation5] sm:$0xff] %v42
      %45 = vst [vmem:[#allocation5 + $0x8] sm:$0xff] %v42
    $region25: #{tpu_custom_call.1} parent=1 // pred_fallthru
      _
    %v46 = vld [vmem:[%s1] sm:$0xf]
    %v47 = vld [vmem:[%s1 + $0x4] sm:$0xf]
    %v48 = vld [vmem:[%s2] sm:$0xf]
    %v51 = vunpack.c.l.b16 %v46
    %v52 = vunpack.c.l.b16 %v47
    %v53 = vpack.c.b16 %v52, %v51
    %vm54 = vcmask 64512
    %v56 = vsel %vm54, %v53, 0
    %vm58 = vcmask 1043456
    %v60 = vsel %vm58, %v48, 0
    %62 = vmatprep.subr.bf16.mxu0 0
    %63 = vmatpush1.bf16.msra.mxu0 0
    %64 = vmatprep.subr.bf16.mxu0 0
    %65 = vmatpush1.bf16.msra.mxu0 0
    %66 = vmatprep.subr.bf16.mxu0 0
    %67 = vmatpush1.bf16.msra.mxu0 0
    %68 = vmatprep.subr.bf16.mxu0 0
    %69 = vmatpush1.bf16.msra.mxu0 0
    %70 = vmatprep.subr.bf16.mxu0 0
    %71 = vmatpush1.bf16.msra.mxu0 0
    %72 = vmatprep.subr.bf16.mxu0 0
    %73 = vmatpush1.bf16.msra.mxu0 0
    %74 = vmatprep.subr.bf16.mxu0 0
    %75 = vmatpush1.bf16.msra.mxu0 0
    %76 = vmatprep.subr.bf16.mxu0 0
    %77 = vmatpush1.bf16.msra.mxu0 %v60
    %78 = vmatprep.subr.bf16.mxu0 0
    %79 = vmatpush2.bf16.msra.mxu0 0
    %80 = vmatprep.subr.bf16.mxu0 0
    %81 = vmatpush2.bf16.msra.mxu0 0
    %82 = vmatprep.subr.bf16.mxu0 0
    %83 = vmatpush2.bf16.msra.mxu0 0
    %84 = vmatprep.subr.bf16.mxu0 0
    %85 = vmatpush2.bf16.msra.mxu0 0
    %86 = vmatprep.subr.bf16.mxu0 0
    %87 = vmatpush2.bf16.msra.mxu0 0
    %88 = vmatprep.subr.bf16.mxu0 0
    %89 = vmatpush2.bf16.msra.mxu0 0
    %90 = vmatprep.subr.bf16.mxu0 0
    %91 = vmatpush2.bf16.msra.mxu0 0
    %92 = vmatprep.subr.bf16.mxu0 0
    %93 = vmatpush2.bf16.msra.mxu0 0
    %94 = vmatprep.mubr.bf16.mxu0 0
    %95 = vmatmul.mubr.bf16.gmra.mxu0 %v56
    %v96 = vpop.f32.mrf.mxu0
    %v97 = vadd.f32 0.0, %v96
    %v98 = vpop.f32.mrf.mxu0
    %v99 = vpop.f32.mrf.mxu0
    %v100 = vadd.f32 0.0, %v99
    %v101 = vpop.f32.mrf.mxu0
    %102 = vdwg.mxu0
    %v103 = vpack.c.bf16 %v100, %v97
    %v104 = vld [vmem:[#allocation5] sm:$0xff]
    %v105 = vld [vmem:[#allocation5 + $0x8] sm:$0xff]
    %v106 = vld [vmem:[#allocation2] sm:$0xf]
    %v107 = vld [vmem:[#allocation2 + $0x4] sm:$0xf]
    %v110 = vunpack.c.l.b16 %v106
    %v111 = vunpack.c.l.b16 %v107
    %v112 = vpack.c.b16 %v111, %v110
    %vm113 = vcmask 130048
    %v115 = vsel %vm113, %v112, 0
    %117 = vmatprep.subr.bf16.mxu0 0
    %118 = vmatpush1.bf16.msra.mxu0 0
    %119 = vmatprep.subr.bf16.mxu0 0
    %120 = vmatpush1.bf16.msra.mxu0 0
    %121 = vmatprep.subr.bf16.mxu0 0
    %122 = vmatpush1.bf16.msra.mxu0 0
    %123 = vmatprep.subr.bf16.mxu0 0
    %124 = vmatpush1.bf16.msra.mxu0 0
    %125 = vmatprep.subr.bf16.mxu0 0
    %126 = vmatpush1.bf16.msra.mxu0 0
    %127 = vmatprep.subr.bf16.mxu0 0
    %128 = vmatpush1.bf16.msra.mxu0 0
    %129 = vmatprep.subr.bf16.mxu0 0
    %130 = vmatpush1.bf16.msra.mxu0 0
    %131 = vmatprep.subr.bf16.mxu0 0
    %132 = vmatpush1.bf16.msra.mxu0 %v103
    %133 = vmatprep.subr.bf16.mxu0 0
    %134 = vmatpush2.bf16.msra.mxu0 0
    %135 = vmatprep.subr.bf16.mxu0 0
    %136 = vmatpush2.bf16.msra.mxu0 0
    %137 = vmatprep.subr.bf16.mxu0 0
    %138 = vmatpush2.bf16.msra.mxu0 0
    %139 = vmatprep.subr.bf16.mxu0 0
    %140 = vmatpush2.bf16.msra.mxu0 0
    %141 = vmatprep.subr.bf16.mxu0 0
    %142 = vmatpush2.bf16.msra.mxu0 0
    %143 = vmatprep.subr.bf16.mxu0 0
    %144 = vmatpush2.bf16.msra.mxu0 0
    %145 = vmatprep.subr.bf16.mxu0 0
    %146 = vmatpush2.bf16.msra.mxu0 0
    %147 = vmatprep.subr.bf16.mxu0 0
    %148 = vmatpush2.bf16.msra.mxu0 0
    %149 = vmatprep.mubr.bf16.mxu0 0
    %150 = vmatmul.mubr.bf16.gmra.mxu0 %v115
    %v151 = vpop.f32.mrf.mxu0
    %v152 = vadd.f32 0.0, %v151
    %v153 = vpop.f32.mrf.mxu0
    %v154 = vpop.f32.mrf.mxu0
    %v155 = vadd.f32 0.0, %v154
    %v156 = vpop.f32.mrf.mxu0
    %157 = vdwg.mxu0
    %v158 = vadd.f32 %v104, %v152
    %v159 = vadd.f32 %v105, %v155
    %160 = vst [vmem:[#allocation5] sm:$0xff] %v158
    %161 = vst [vmem:[#allocation5 + $0x8] sm:$0xff] %v159
    %s162 = scalar_lea.vmem %s2, 4
    %v163 = vld [vmem:[%s162] sm:$0xf]
    %v165 = vsel %vm58, %v163, 0
    %167 = vmatprep.subr.bf16.mxu0 0
    %168 = vmatpush1.bf16.msra.mxu0 0
    %169 = vmatprep.subr.bf16.mxu0 0
    %170 = vmatpush1.bf16.msra.mxu0 0
    %171 = vmatprep.subr.bf16.mxu0 0
    %172 = vmatpush1.bf16.msra.mxu0 0
    %173 = vmatprep.subr.bf16.mxu0 0
    %174 = vmatpush1.bf16.msra.mxu0 0
    %175 = vmatprep.subr.bf16.mxu0 0
    %176 = vmatpush1.bf16.msra.mxu0 0
    %177 = vmatprep.subr.bf16.mxu0 0
    %178 = vmatpush1.bf16.msra.mxu0 0
    %179 = vmatprep.subr.bf16.mxu0 0
    %180 = vmatpush1.bf16.msra.mxu0 0
    %181 = vmatprep.subr.bf16.mxu0 0
    %182 = vmatpush1.bf16.msra.mxu0 %v165
    %183 = vmatprep.subr.bf16.mxu0 0
    %184 = vmatpush2.bf16.msra.mxu0 0
    %185 = vmatprep.subr.bf16.mxu0 0
    %186 = vmatpush2.bf16.msra.mxu0 0
    %187 = vmatprep.subr.bf16.mxu0 0
    %188 = vmatpush2.bf16.msra.mxu0 0
    %189 = vmatprep.subr.bf16.mxu0 0
    %190 = vmatpush2.bf16.msra.mxu0 0
    %191 = vmatprep.subr.bf16.mxu0 0
    %192 = vmatpush2.bf16.msra.mxu0 0
    %193 = vmatprep.subr.bf16.mxu0 0
    %194 = vmatpush2.bf16.msra.mxu0 0
    %195 = vmatprep.subr.bf16.mxu0 0
    %196 = vmatpush2.bf16.msra.mxu0 0
    %197 = vmatprep.subr.bf16.mxu0 0
    %198 = vmatpush2.bf16.msra.mxu0 0
    %199 = vmatprep.mubr.bf16.mxu0 0
    %200 = vmatmul.mubr.bf16.gmra.mxu0 %v56
    %v201 = vpop.f32.mrf.mxu0
    %v202 = vadd.f32 0.0, %v201
    %v203 = vpop.f32.mrf.mxu0
    %v204 = vpop.f32.mrf.mxu0
    %v205 = vadd.f32 0.0, %v204
    %v206 = vpop.f32.mrf.mxu0
    %207 = vdwg.mxu0
    %v208 = vpack.c.bf16 %v205, %v202
    %v209 = vld [vmem:[#allocation5] sm:$0xff]
    %v210 = vld [vmem:[#allocation5 + $0x8] sm:$0xff]
    %s211 = scalar_lea.vmem [#allocation2], 8
    %v212 = vld [vmem:[%s211] sm:$0xf]
    %v213 = vld [vmem:[%s211 + $0x4] sm:$0xf]
    %v216 = vunpack.c.l.b16 %v212
    %v217 = vunpack.c.l.b16 %v213
    %v218 = vpack.c.b16 %v217, %v216
    %v220 = vsel %vm113, %v218, 0
    %222 = vmatprep.subr.bf16.mxu0 0
    %223 = vmatpush1.bf16.msra.mxu0 0
    %224 = vmatprep.subr.bf16.mxu0 0
    %225 = vmatpush1.bf16.msra.mxu0 0
    %226 = vmatprep.subr.bf16.mxu0 0
    %227 = vmatpush1.bf16.msra.mxu0 0
    %228 = vmatprep.subr.bf16.mxu0 0
    %229 = vmatpush1.bf16.msra.mxu0 0
    %230 = vmatprep.subr.bf16.mxu0 0
    %231 = vmatpush1.bf16.msra.mxu0 0
    %232 = vmatprep.subr.bf16.mxu0 0
    %233 = vmatpush1.bf16.msra.mxu0 0
    %234 = vmatprep.subr.bf16.mxu0 0
    %235 = vmatpush1.bf16.msra.mxu0 0
    %236 = vmatprep.subr.bf16.mxu0 0
    %237 = vmatpush1.bf16.msra.mxu0 %v208
    %238 = vmatprep.subr.bf16.mxu0 0
    %239 = vmatpush2.bf16.msra.mxu0 0
    %240 = vmatprep.subr.bf16.mxu0 0
    %241 = vmatpush2.bf16.msra.mxu0 0
    %242 = vmatprep.subr.bf16.mxu0 0
    %243 = vmatpush2.bf16.msra.mxu0 0
    %244 = vmatprep.subr.bf16.mxu0 0
    %245 = vmatpush2.bf16.msra.mxu0 0
    %246 = vmatprep.subr.bf16.mxu0 0
    %247 = vmatpush2.bf16.msra.mxu0 0
    %248 = vmatprep.subr.bf16.mxu0 0
    %249 = vmatpush2.bf16.msra.mxu0 0
    %250 = vmatprep.subr.bf16.mxu0 0
    %251 = vmatpush2.bf16.msra.mxu0 0
    %252 = vmatprep.subr.bf16.mxu0 0
    %253 = vmatpush2.bf16.msra.mxu0 0
    %254 = vmatprep.mubr.bf16.mxu0 0
    %255 = vmatmul.mubr.bf16.gmra.mxu0 %v220
    %v256 = vpop.f32.mrf.mxu0
    %v257 = vadd.f32 0.0, %v256
    %v258 = vpop.f32.mrf.mxu0
    %v259 = vpop.f32.mrf.mxu0
    %v260 = vadd.f32 0.0, %v259
    %v261 = vpop.f32.mrf.mxu0
    %262 = vdwg.mxu0
    %v263 = vadd.f32 %v209, %v257
    %v264 = vadd.f32 %v210, %v260
    %265 = vst [vmem:[#allocation5] sm:$0xff] %v263
    %266 = vst [vmem:[#allocation5 + $0x8] sm:$0xff] %v264
    %s267 = scalar_lea.vmem %s2, 8
    %v268 = vld [vmem:[%s267] sm:$0xf]
    %v270 = vsel %vm58, %v268, 0
    %272 = vmatprep.subr.bf16.mxu0 0
    %273 = vmatpush1.bf16.msra.mxu0 0
    %274 = vmatprep.subr.bf16.mxu0 0
    %275 = vmatpush1.bf16.msra.mxu0 0
    %276 = vmatprep.subr.bf16.mxu0 0
    %277 = vmatpush1.bf16.msra.mxu0 0
    %278 = vmatprep.subr.bf16.mxu0 0
    %279 = vmatpush1.bf16.msra.mxu0 0
    %280 = vmatprep.subr.bf16.mxu0 0
    %281 = vmatpush1.bf16.msra.mxu0 0
    %282 = vmatprep.subr.bf16.mxu0 0
    %283 = vmatpush1.bf16.msra.mxu0 0
    %284 = vmatprep.subr.bf16.mxu0 0
    %285 = vmatpush1.bf16.msra.mxu0 0
    %286 = vmatprep.subr.bf16.mxu0 0
    %287 = vmatpush1.bf16.msra.mxu0 %v270
    %288 = vmatprep.subr.bf16.mxu0 0
    %289 = vmatpush2.bf16.msra.mxu0 0
    %290 = vmatprep.subr.bf16.mxu0 0
    %291 = vmatpush2.bf16.msra.mxu0 0
    %292 = vmatprep.subr.bf16.mxu0 0
    %293 = vmatpush2.bf16.msra.mxu0 0
    %294 = vmatprep.subr.bf16.mxu0 0
    %295 = vmatpush2.bf16.msra.mxu0 0
    %296 = vmatprep.subr.bf16.mxu0 0
    %297 = vmatpush2.bf16.msra.mxu0 0
    %298 = vmatprep.subr.bf16.mxu0 0
    %299 = vmatpush2.bf16.msra.mxu0 0
    %300 = vmatprep.subr.bf16.mxu0 0
    %301 = vmatpush2.bf16.msra.mxu0 0
    %302 = vmatprep.subr.bf16.mxu0 0
    %303 = vmatpush2.bf16.msra.mxu0 0
    %304 = vmatprep.mubr.bf16.mxu0 0
    %305 = vmatmul.mubr.bf16.gmra.mxu0 %v56
    %v306 = vpop.f32.mrf.mxu0
    %v307 = vadd.f32 0.0, %v306
    %v308 = vpop.f32.mrf.mxu0
    %v309 = vpop.f32.mrf.mxu0
    %v310 = vadd.f32 0.0, %v309
    %v311 = vpop.f32.mrf.mxu0
    %312 = vdwg.mxu0
    %v313 = vpack.c.bf16 %v310, %v307
    %v314 = vld [vmem:[#allocation5] sm:$0xff]
    %v315 = vld [vmem:[#allocation5 + $0x8] sm:$0xff]
    %s316 = scalar_lea.vmem [#allocation2], 16
    %v317 = vld [vmem:[%s316] sm:$0xf]
    %v318 = vld [vmem:[%s316 + $0x4] sm:$0xf]
    %v321 = vunpack.c.l.b16 %v317
    %v322 = vunpack.c.l.b16 %v318
    %v323 = vpack.c.b16 %v322, %v321
    %v325 = vsel %vm113, %v323, 0
    %327 = vmatprep.subr.bf16.mxu0 0
    %328 = vmatpush1.bf16.msra.mxu0 0
    %329 = vmatprep.subr.bf16.mxu0 0
    %330 = vmatpush1.bf16.msra.mxu0 0
    %331 = vmatprep.subr.bf16.mxu0 0
    %332 = vmatpush1.bf16.msra.mxu0 0
    %333 = vmatprep.subr.bf16.mxu0 0
    %334 = vmatpush1.bf16.msra.mxu0 0
    %335 = vmatprep.subr.bf16.mxu0 0
    %336 = vmatpush1.bf16.msra.mxu0 0
    %337 = vmatprep.subr.bf16.mxu0 0
    %338 = vmatpush1.bf16.msra.mxu0 0
    %339 = vmatprep.subr.bf16.mxu0 0
    %340 = vmatpush1.bf16.msra.mxu0 0
    %341 = vmatprep.subr.bf16.mxu0 0
    %342 = vmatpush1.bf16.msra.mxu0 %v313
    %343 = vmatprep.subr.bf16.mxu0 0
    %344 = vmatpush2.bf16.msra.mxu0 0
    %345 = vmatprep.subr.bf16.mxu0 0
    %346 = vmatpush2.bf16.msra.mxu0 0
    %347 = vmatprep.subr.bf16.mxu0 0
    %348 = vmatpush2.bf16.msra.mxu0 0
    %349 = vmatprep.subr.bf16.mxu0 0
    %350 = vmatpush2.bf16.msra.mxu0 0
    %351 = vmatprep.subr.bf16.mxu0 0
    %352 = vmatpush2.bf16.msra.mxu0 0
    %353 = vmatprep.subr.bf16.mxu0 0
    %354 = vmatpush2.bf16.msra.mxu0 0
    %355 = vmatprep.subr.bf16.mxu0 0
    %356 = vmatpush2.bf16.msra.mxu0 0
    %357 = vmatprep.subr.bf16.mxu0 0
    %358 = vmatpush2.bf16.msra.mxu0 0
    %359 = vmatprep.mubr.bf16.mxu0 0
    %360 = vmatmul.mubr.bf16.gmra.mxu0 %v325
    %v361 = vpop.f32.mrf.mxu0
    %v362 = vadd.f32 0.0, %v361
    %v363 = vpop.f32.mrf.mxu0
    %v364 = vpop.f32.mrf.mxu0
    %v365 = vadd.f32 0.0, %v364
    %v366 = vpop.f32.mrf.mxu0
    %367 = vdwg.mxu0
    %v368 = vadd.f32 %v314, %v362
    %v369 = vadd.f32 %v315, %v365
    %370 = vst [vmem:[#allocation5] sm:$0xff] %v368
    %371 = vst [vmem:[#allocation5 + $0x8] sm:$0xff] %v369
    // Predicated region
    $region26: #{tpu_custom_call.1} parent=1 // pred_check
      _
    $region27: #{tpu_custom_call.1} parent=1 // pred_check_branch
      %373 = sbr.rel (0) target = $region29
    $region28: #{tpu_custom_call.1} parent=1 // pred_region
      %s375 = ssub.s32 256, 256
      %376 = vsyncadd [#allocation4], %s375
      %s377 = sshll.u32 [#allocation5], 4
      %s378 = int_to_ptr.vmem [resolvable:$true] %s377
      %383 = dma.vmem_to_hbm [thread:$0]  %s378, 256, %s4, [#allocation4], 128, 128, 8
    $region29: #{tpu_custom_call.1} parent=1 // pred_fallthru
      _
    // Predicated region
    $region30: #{tpu_custom_call.1} parent=1 // pred_check
      _
    $region31: #{tpu_custom_call.1} parent=1 // pred_check_branch
      %385 = sbr.rel (0) target = $region33
    $region32: #{tpu_custom_call.1} parent=1 // pred_region
      %386 = dma.done [#allocation4], 256
    $region33: #{tpu_custom_call.1} parent=1 // pred_fallthru
      _
    %387 = vsyncpa [#allocation3], 1
    %388 = vsyncpa [#allocation4], 1

</llo_original>
